<compile_context>
chip_gen: v5e
topology: v5e:2x2
jax: 0.10.0
libtpu: 0.0.40
codegen_flags: <defaults>
</compile_context>

<pallas_src>
import functools

import numpy as np

import jax
import jax.numpy as jnp
from jax.experimental import pallas as pl
from jax.experimental.pallas import tpu as pltpu

BN_EPS = 1e-5


def _round_up(x, m):
    return (x + m - 1) // m * m


def _vmem_capacity_bytes():
    """Physical VMEM per TensorCore (64 MiB on v7x, 128 MiB on v5e/v6e)."""
    try:
        info = pltpu.get_tpu_info()
        cap = getattr(info, "vmem_capacity_bytes", None)
        if cap:
            return int(cap)
    except Exception:
        pass
    return 64 * 1024 * 1024   # conservative default (v7x)


def _clser_kernel(ph00_ref, ph01_ref, ph10_ref, ph11_ref,
                  mask_ref, pool_ref, w9_ref,
                  gamma_ref, beta_ref,
                  fc1_wt_ref, fc1_b_ref, fc2_wt_ref, fc2_b_ref,
                  pred_t_ref,
                  conv_buf_ref, sum_ref, sumsq_ref,
                  *, n_blocks, n_imgs, acc_w, wp, ho, wo):
    j = pl.program_id(0)

    @pl.when(j == 0)
    def _():
        sum_ref[...] = jnp.zeros_like(sum_ref)
        sumsq_ref[...] = jnp.zeros_like(sumsq_ref)

    phases = (ph00_ref, ph01_ref, ph10_ref, ph11_ref)

    # In-kernel "im2col": the 3x3 stride-2 conv as 9 accumulated matmuls of
    # the (C,C) weight taps against statically shifted contiguous slices of
    # the flattened stride-2 phase planes.
    acc = None
    for ki in range(3):
        for kj in range(3):
            p = (ki % 2) * 2 + (kj % 2)
            off = (ki // 2) * wp + (kj // 2)
            w_t = w9_ref[ki * 3 + kj]                       # (C, C) bf16
            rhs = phases[p][:, off:off + acc_w]             # (C, A) bf16
            part = jnp.dot(w_t, rhs, preferred_element_type=jnp.float32)
            acc = part if acc is None else acc + part
    # acc: (C, A) f32 conv output (bias dropped: cancelled by BN mean).

    # Keep the conv tile resident (bf16) for the post-stats normalize/pool/FC.
    start = pl.multiple_of(j * acc_w, 128)
    conv_buf_ref[:, pl.ds(start, acc_w)] = acc.astype(conv_buf_ref.dtype)

    # Streaming BN batch statistics, lane-reduced to (C, 1) per grid step.
    masked = acc * mask_ref[...]
    sum_ref[...] += jnp.sum(masked, axis=1, keepdims=True)
    sumsq_ref[...] += jnp.sum(masked * acc, axis=1, keepdims=True)

    @pl.when(j == n_blocks - 1)
    def _():
        n_valid = float(n_imgs * ho * wo)
        mean = sum_ref[...] / n_valid                       # (C, 1)
        ex2 = sumsq_ref[...] / n_valid
        var = jnp.maximum(ex2 - mean * mean, 0.0)           # biased var
        scale = gamma_ref[...] * jax.lax.rsqrt(var + BN_EPS)
        shift = beta_ref[...] - mean * scale

        # Normalize + ReLU + per-image global average pool.  Masking of the
        # junk lanes and the pool itself are one (C,A)@(A,G) matmul per block
        # against a precomputed 0/1 selector -- no iota/where in the tail.
        inv_pool = 1.0 / float(ho * wo)
        cols = []
        for blk in range(n_blocks):
            y = conv_buf_ref[:, blk * acc_w:(blk + 1) * acc_w].astype(jnp.float32)
            y = jnp.maximum(y * scale + shift, 0.0)
            pooled = jnp.dot(y.astype(jnp.bfloat16), pool_ref[...],
                             preferred_element_type=jnp.float32)    # (C, G)
            cols.append(pooled * inv_pool)
        feat_t = cols[0] if n_blocks == 1 else jnp.concatenate(cols, axis=1)
        feat_t = feat_t[:, :n_imgs]                         # (C, B)

        # fcs[0]: Linear(C,C) -> ReLU -> Linear(C,2), kept transposed so the
        # whole tail stays in the lane-dense (C, .) orientation.
        h = jnp.dot(fc1_wt_ref[...], feat_t.astype(jnp.bfloat16),
                    preferred_element_type=jnp.float32) + fc1_b_ref[...]
        h = jnp.maximum(h, 0.0)
        out = jnp.dot(fc2_wt_ref[...], h.astype(jnp.bfloat16),
                      preferred_element_type=jnp.float32) + fc2_b_ref[...]
        pred_t_ref[...] = out.astype(pred_t_ref.dtype)      # (2, B)


def lidc_i2l_feat_clser_forward(x, params):
    """Forward pass. x: (B, C, H, W) float32 NCHW. Returns [pred], pred (B, 2)."""
    B, C, H, W = x.shape
    Ho, Wo = (H + 1) // 2, (W + 1) // 2          # conv k=3, s=2, p=1 output size
    Hp, Wp = Ho + 1, Wo + 1                      # stride-2 phase-plane size
    S = Hp * Wp                                  # flattened positions per image

    vmem_cap = _vmem_capacity_bytes()

    def plan(g):
        a = _round_up(g * S, 128)                # accumulated lane width / block
        extra = _round_up(Wp + 1, 128)           # tail so shifted reads stay in-block
        bw = a + extra                           # streamed block width per phase
        nb = -(-B // g)
        need = (4 * 2 * C * bw * 2               # 4 phases, double-buffered, bf16
                + C * nb * a * 2                 # resident bf16 conv buffer
                + a * 4 + a * g * 2              # mask + pool selector
                + 9 * C * C * 2 + 8 * C * 4      # weights
                + 2 * (1 << 20))                 # margin
        return a, extra, bw, nb, need

    # Images per block: target a >= ~2k lane tile, clamped by batch and VMEM.
    G = max(1, min(B, -(-2048 // S)))
    A, EXTRA, BW, n_blocks, vmem_need = plan(G)
    while G > 1 and vmem_need > int(0.8 * vmem_cap):
        G = max(1, G // 2)
        A, EXTRA, BW, n_blocks, vmem_need = plan(G)
    B_pad = n_blocks * G

    # ---- Host-side relayout (pure pad/reshape, ~1x the input bytes). --------
    xp = jnp.pad(x, ((0, 0), (0, 0),
                     (1, 2 * Hp - H - 1), (1, 2 * Wp - W - 1)))

    def phase_plane(a_off, b_off):
        ph = xp[:, :, a_off::2, b_off::2]                    # (B, C, Hp, Wp)
        f = ph.reshape(B, C, S).transpose(1, 0, 2)           # (C, B, S)
        f = jnp.pad(f, ((0, 0), (0, B_pad - B), (0, 0)))     # zero fake images
        f = f.reshape(C, n_blocks, G * S)
        f = jnp.pad(f, ((0, 0), (0, 0), (0, BW - G * S)))    # per-block tail pad
        return f.reshape(C, n_blocks * BW).astype(jnp.bfloat16)

    phases = [phase_plane(a, b) for a in (0, 1) for b in (0, 1)]

    # Validity of each accumulator lane (junk lanes have i == Ho or j == Wo).
    n_loc = np.arange(S)
    valid = (((n_loc // Wp) < Ho) & ((n_loc % Wp) < Wo)).astype(np.float32)
    mask_np = np.zeros((1, A), np.float32)
    mask_np[0, :G * S] = np.tile(valid, G)
    mask = jnp.asarray(mask_np)

    pool_np = np.zeros((A, G), np.float32)
    for g in range(G):
        pool_np[g * S:(g + 1) * S, g] = valid
    pool_sel = jnp.asarray(pool_np, dtype=jnp.bfloat16)      # 0/1, exact in bf16

    # ---- Parameters. --------------------------------------------------------
    # 9 conv weight taps, tap t = ki*3 + kj -> (C_out, C_in).
    w9 = params["conv_w"].transpose(2, 3, 0, 1).reshape(9, C, C).astype(jnp.bfloat16)
    # NOTE: the conv bias is cancelled exactly by the training-mode BN mean
    # subtraction, so it is never passed to the kernel.
    gamma = params["bn_gamma"].reshape(C, 1).astype(jnp.float32)
    beta = params["bn_beta"].reshape(C, 1).astype(jnp.float32)
    # Params use the math convention y = x @ W (in, out); torch nn.Linear
    # stores (out, in) and must be transposed at import time.
    fc1_wt = params["fc1_w"].T.astype(jnp.bfloat16)           # (C, C) = (out, in)
    fc1_b = params["fc1_b"].reshape(C, 1).astype(jnp.float32)
    fc2_wt = params["fc2_w"].T.astype(jnp.bfloat16)           # (2, C)
    fc2_b = params["fc2_b"].reshape(2, 1).astype(jnp.float32)

    kernel = functools.partial(_clser_kernel, n_blocks=n_blocks, n_imgs=B,
                               acc_w=A, wp=Wp, ho=Ho, wo=Wo)

    def resident(shape):
        nd = len(shape)
        return pl.BlockSpec(shape, lambda j, _n=nd: (0,) * _n)

    phase_spec = pl.BlockSpec((C, BW), lambda j: (0, j))
    in_specs = [phase_spec] * 4 + [
        resident((1, A)),                      # validity mask
        resident((A, G)),                      # pool selector
        resident((9, C, C)),                   # conv weight taps
        resident((C, 1)), resident((C, 1)),    # bn gamma, beta
        resident((C, C)), resident((C, 1)),    # fc1 weight^T, bias
        resident((2, C)), resident((2, 1)),    # fc2 weight^T, bias
    ]
    out_spec = pl.BlockSpec((2, B), lambda j: (0, 0))

    scratch_shapes = [
        pltpu.VMEM((C, n_blocks * A), jnp.bfloat16),   # resident conv output
        pltpu.VMEM((C, 1), jnp.float32),               # streaming sum
        pltpu.VMEM((C, 1), jnp.float32),               # streaming sum of squares
    ]

    vmem_limit = int(min(max(2 * vmem_need, 32 << 20), int(0.9 * vmem_cap)))
    vmem_limit = max(vmem_limit, vmem_need)

    flops = int(2 * 9 * C * C * n_blocks * A             # conv taps
                + 2 * C * A * G * n_blocks                # pool matmul
                + 2 * B * (C * C + 2 * C))                # FCs
    bytes_accessed = int(4 * C * n_blocks * BW * 2 + A * 4 + A * G * 2
                         + 9 * C * C * 2 + 8 * C * 4 + B * 2 * 4)

    grid_spec = pltpu.PrefetchScalarGridSpec(
        num_scalar_prefetch=0,
        grid=(n_blocks,),
        in_specs=in_specs,
        out_specs=out_spec,
        scratch_shapes=scratch_shapes,
    )

    pred_t = pl.pallas_call(
        kernel,
        out_shape=jax.ShapeDtypeStruct((2, B), jnp.float32),
        grid_spec=grid_spec,
        compiler_params=pltpu.CompilerParams(
            # Shared BN/pool accumulators + resident conv buffer keep the grid
            # axis sequential (see v7x dual-core TODO at the top of the file).
            dimension_semantics=("arbitrary",),
            vmem_limit_bytes=vmem_limit,
        ),
        cost_estimate=pl.CostEstimate(flops=flops, transcendentals=C,
                                      bytes_accessed=bytes_accessed),
    )(*phases, mask, pool_sel, w9, gamma, beta, fc1_wt, fc1_b, fc2_wt, fc2_b)

    return [pred_t.T]     # (B, 2)


def _reference_forward(x, params):
    """Pure-JAX reference (for verification)."""
    B, C, H, W = x.shape
    conv = jax.lax.conv_general_dilated(
        x, params["conv_w"], window_strides=(2, 2), padding=((1, 1), (1, 1)),
        dimension_numbers=("NCHW", "OIHW", "NCHW"),
        precision=jax.lax.Precision.HIGHEST)
    conv = conv + params["conv_b"].reshape(1, C, 1, 1)
    mean = conv.mean(axis=(0, 2, 3), keepdims=True)
    var = ((conv - mean) ** 2).mean(axis=(0, 2, 3), keepdims=True)
    y = (conv - mean) / jnp.sqrt(var + BN_EPS)
    y = y * params["bn_gamma"].reshape(1, C, 1, 1) + params["bn_beta"].reshape(1, C, 1, 1)
    y = jnp.maximum(y, 0.0)
    feat = y.mean(axis=(2, 3))                               # (B, C)
    h = jnp.maximum(feat @ params["fc1_w"] + params["fc1_b"], 0.0)
    return [h @ params["fc2_w"] + params["fc2_b"]]


def init_params(key, in_dim):
    ks = jax.random.split(key, 8)
    C = in_dim
    return {
        "conv_w": 0.1 * jax.random.normal(ks[0], (C, C, 3, 3), jnp.float32),
        "conv_b": 0.1 * jax.random.normal(ks[1], (C,), jnp.float32),
        "bn_gamma": 1.0 + 0.1 * jax.random.normal(ks[2], (C,), jnp.float32),
        "bn_beta": 0.1 * jax.random.normal(ks[3], (C,), jnp.float32),
        "fc1_w": 0.1 * jax.random.normal(ks[4], (C, C), jnp.float32),
        "fc1_b": 0.1 * jax.random.normal(ks[5], (C,), jnp.float32),
        "fc2_w": 0.1 * jax.random.normal(ks[6], (C, 2), jnp.float32),
        "fc2_b": 0.1 * jax.random.normal(ks[7], (2,), jnp.float32),
    }


if __name__ == "__main__":
    B, C, H = 2, 8, 16   # x.shape = (B, C, H, H), in_dim = C
    key = jax.random.PRNGKey(0)
    kx, kp = jax.random.split(key)
    x = jax.random.normal(kx, (B, C, H, H), jnp.float32)
    params = init_params(kp, C)

    pred = lidc_i2l_feat_clser_forward(x, params)
    pred = [jax.block_until_ready(p) for p in pred]

    ref = _reference_forward(x, params)
    assert len(pred) == 1 and pred[0].shape == (B, 2)
    err = float(jnp.max(jnp.abs(pred[0] - ref[0])))
    assert err < 1e-2, f"mismatch vs reference: {err}"

    print("KERNEL_OK")
</pallas_src>

<mosaic_0001>
module attributes {stable_mosaic.version = 11 : i64} {
  func.func @_clser_kernel(%arg0: i32, %arg1: memref<8x384xbf16, #tpu.memory_space<vmem>>, %arg2: memref<8x384xbf16, #tpu.memory_space<vmem>>, %arg3: memref<8x384xbf16, #tpu.memory_space<vmem>>, %arg4: memref<8x384xbf16, #tpu.memory_space<vmem>>, %arg5: memref<1x256xf32, #tpu.memory_space<vmem>>, %arg6: memref<256x2xbf16, #tpu.memory_space<vmem>>, %arg7: memref<9x8x8xbf16, #tpu.memory_space<vmem>>, %arg8: memref<8x1xf32, #tpu.memory_space<vmem>>, %arg9: memref<8x1xf32, #tpu.memory_space<vmem>>, %arg10: memref<8x8xbf16, #tpu.memory_space<vmem>>, %arg11: memref<8x1xf32, #tpu.memory_space<vmem>>, %arg12: memref<2x8xbf16, #tpu.memory_space<vmem>>, %arg13: memref<2x1xf32, #tpu.memory_space<vmem>>, %arg14: memref<2x2xf32, #tpu.memory_space<vmem>>, %arg15: memref<8x256xbf16, #tpu.memory_space<vmem>>, %arg16: memref<8x1xf32, #tpu.memory_space<vmem>>, %arg17: memref<8x1xf32, #tpu.memory_space<vmem>>) attributes {dimension_semantics = [#tpu.dimension_semantics<arbitrary>], iteration_bounds = array<i64: 1>, scalar_prefetch = 0 : i64, scratch_operands = 3 : i64, tpu.core_type = #tpu.core_type<tc>, window_params = [{transform_indices = @transform_0, window_bounds = array<i64: 8, 384>}, {transform_indices = @transform_1, window_bounds = array<i64: 8, 384>}, {transform_indices = @transform_2, window_bounds = array<i64: 8, 384>}, {transform_indices = @transform_3, window_bounds = array<i64: 8, 384>}, {pipeline_mode = #tpu.pipeline_mode<synchronous>, transform_indices = @transform_4, window_bounds = array<i64: 1, 256>}, {pipeline_mode = #tpu.pipeline_mode<synchronous>, transform_indices = @transform_5, window_bounds = array<i64: 256, 2>}, {pipeline_mode = #tpu.pipeline_mode<synchronous>, transform_indices = @transform_6, window_bounds = array<i64: 9, 8, 8>}, {pipeline_mode = #tpu.pipeline_mode<synchronous>, transform_indices = @transform_7, window_bounds = array<i64: 8, 1>}, {pipeline_mode = #tpu.pipeline_mode<synchronous>, transform_indices = @transform_8, window_bounds = array<i64: 8, 1>}, {pipeline_mode = #tpu.pipeline_mode<synchronous>, transform_indices = @transform_9, window_bounds = array<i64: 8, 8>}, {pipeline_mode = #tpu.pipeline_mode<synchronous>, transform_indices = @transform_10, window_bounds = array<i64: 8, 1>}, {pipeline_mode = #tpu.pipeline_mode<synchronous>, transform_indices = @transform_11, window_bounds = array<i64: 2, 8>}, {pipeline_mode = #tpu.pipeline_mode<synchronous>, transform_indices = @transform_12, window_bounds = array<i64: 2, 1>}, {pipeline_mode = #tpu.pipeline_mode<synchronous>, transform_indices = @transform_13, window_bounds = array<i64: 2, 2>}]} {
    %c0_i32 = arith.constant 0 : i32
    %0 = arith.cmpi eq, %arg0, %c0_i32 : i32
    %1 = arith.extui %0 : i1 to i32
    %c0_i32_0 = arith.constant 0 : i32
    %2 = arith.cmpi ne, %1, %c0_i32_0 : i32
    scf.if %2 {
      %cst_58 = arith.constant 0.000000e+00 : f32
      %69 = vector.broadcast %cst_58 : f32 to vector<8x1xf32>
      %c0_59 = arith.constant 0 : index
      %c0_60 = arith.constant 0 : index
      %70 = vector.load %arg16[%c0_59, %c0_60] : memref<8x1xf32, #tpu.memory_space<vmem>>, vector<8x1xf32>
      tpu.vector_store %arg16[%c0_59, %c0_60], %69 {strides = array<i32>} : memref<8x1xf32, #tpu.memory_space<vmem>>, vector<8x1xf32>,
      %cst_61 = arith.constant 0.000000e+00 : f32
      %71 = vector.broadcast %cst_61 : f32 to vector<8x1xf32>
      %c0_62 = arith.constant 0 : index
      %c0_63 = arith.constant 0 : index
      %72 = vector.load %arg17[%c0_62, %c0_63] : memref<8x1xf32, #tpu.memory_space<vmem>>, vector<8x1xf32>
      tpu.vector_store %arg17[%c0_62, %c0_63], %71 {strides = array<i32>} : memref<8x1xf32, #tpu.memory_space<vmem>>, vector<8x1xf32>,
    } else {
    }
    %c0 = arith.constant 0 : index
    %c0_1 = arith.constant 0 : index
    %c0_2 = arith.constant 0 : index
    %3 = vector.load %arg7[%c0, %c0_1, %c0_2] : memref<9x8x8xbf16, #tpu.memory_space<vmem>>, vector<1x8x8xbf16>
    %4 = vector.shape_cast %3 : vector<1x8x8xbf16> to vector<8x8xbf16>
    %c0_3 = arith.constant 0 : index
    %c0_4 = arith.constant 0 : index
    %5 = vector.load %arg1[%c0_3, %c0_4] : memref<8x384xbf16, #tpu.memory_space<vmem>>, vector<8x256xbf16>
    %cst = arith.constant dense<0.000000e+00> : vector<8x256xf32>
    %6 = tpu.matmul %4, %5, %cst {dimension_numbers = #tpu.dot_dimension_numbers<[1], [0], [0], [1], [0, 0, 1, 1], [], []>} : vector<8x8xbf16>, vector<8x256xbf16>, vector<8x256xf32> -> vector<8x256xf32>
    %c1 = arith.constant 1 : index
    %c0_5 = arith.constant 0 : index
    %c0_6 = arith.constant 0 : index
    %7 = vector.load %arg7[%c1, %c0_5, %c0_6] : memref<9x8x8xbf16, #tpu.memory_space<vmem>>, vector<1x8x8xbf16>
    %8 = vector.shape_cast %7 : vector<1x8x8xbf16> to vector<8x8xbf16>
    %c0_7 = arith.constant 0 : index
    %c0_8 = arith.constant 0 : index
    %9 = vector.load %arg2[%c0_7, %c0_8] : memref<8x384xbf16, #tpu.memory_space<vmem>>, vector<8x256xbf16>
    %cst_9 = arith.constant dense<0.000000e+00> : vector<8x256xf32>
    %10 = tpu.matmul %8, %9, %cst_9 {dimension_numbers = #tpu.dot_dimension_numbers<[1], [0], [0], [1], [0, 0, 1, 1], [], []>} : vector<8x8xbf16>, vector<8x256xbf16>, vector<8x256xf32> -> vector<8x256xf32>
    %11 = arith.addf %6, %10 : vector<8x256xf32>
    %c2 = arith.constant 2 : index
    %c0_10 = arith.constant 0 : index
    %c0_11 = arith.constant 0 : index
    %12 = vector.load %arg7[%c2, %c0_10, %c0_11] : memref<9x8x8xbf16, #tpu.memory_space<vmem>>, vector<1x8x8xbf16>
    %13 = vector.shape_cast %12 : vector<1x8x8xbf16> to vector<8x8xbf16>
    %c0_12 = arith.constant 0 : index
    %c1_13 = arith.constant 1 : index
    %14 = vector.load %arg1[%c0_12, %c1_13] : memref<8x384xbf16, #tpu.memory_space<vmem>>, vector<8x256xbf16>
    %cst_14 = arith.constant dense<0.000000e+00> : vector<8x256xf32>
    %15 = tpu.matmul %13, %14, %cst_14 {dimension_numbers = #tpu.dot_dimension_numbers<[1], [0], [0], [1], [0, 0, 1, 1], [], []>} : vector<8x8xbf16>, vector<8x256xbf16>, vector<8x256xf32> -> vector<8x256xf32>
    %16 = arith.addf %11, %15 : vector<8x256xf32>
    %c3 = arith.constant 3 : index
    %c0_15 = arith.constant 0 : index
    %c0_16 = arith.constant 0 : index
    %17 = vector.load %arg7[%c3, %c0_15, %c0_16] : memref<9x8x8xbf16, #tpu.memory_space<vmem>>, vector<1x8x8xbf16>
    %18 = vector.shape_cast %17 : vector<1x8x8xbf16> to vector<8x8xbf16>
    %c0_17 = arith.constant 0 : index
    %c0_18 = arith.constant 0 : index
    %19 = vector.load %arg3[%c0_17, %c0_18] : memref<8x384xbf16, #tpu.memory_space<vmem>>, vector<8x256xbf16>
    %cst_19 = arith.constant dense<0.000000e+00> : vector<8x256xf32>
    %20 = tpu.matmul %18, %19, %cst_19 {dimension_numbers = #tpu.dot_dimension_numbers<[1], [0], [0], [1], [0, 0, 1, 1], [], []>} : vector<8x8xbf16>, vector<8x256xbf16>, vector<8x256xf32> -> vector<8x256xf32>
    %21 = arith.addf %16, %20 : vector<8x256xf32>
    %c4 = arith.constant 4 : index
    %c0_20 = arith.constant 0 : index
    %c0_21 = arith.constant 0 : index
    %22 = vector.load %arg7[%c4, %c0_20, %c0_21] : memref<9x8x8xbf16, #tpu.memory_space<vmem>>, vector<1x8x8xbf16>
    %23 = vector.shape_cast %22 : vector<1x8x8xbf16> to vector<8x8xbf16>
    %c0_22 = arith.constant 0 : index
    %c0_23 = arith.constant 0 : index
    %24 = vector.load %arg4[%c0_22, %c0_23] : memref<8x384xbf16, #tpu.memory_space<vmem>>, vector<8x256xbf16>
    %cst_24 = arith.constant dense<0.000000e+00> : vector<8x256xf32>
    %25 = tpu.matmul %23, %24, %cst_24 {dimension_numbers = #tpu.dot_dimension_numbers<[1], [0], [0], [1], [0, 0, 1, 1], [], []>} : vector<8x8xbf16>, vector<8x256xbf16>, vector<8x256xf32> -> vector<8x256xf32>
    %26 = arith.addf %21, %25 : vector<8x256xf32>
    %c5 = arith.constant 5 : index
    %c0_25 = arith.constant 0 : index
    %c0_26 = arith.constant 0 : index
    %27 = vector.load %arg7[%c5, %c0_25, %c0_26] : memref<9x8x8xbf16, #tpu.memory_space<vmem>>, vector<1x8x8xbf16>
    %28 = vector.shape_cast %27 : vector<1x8x8xbf16> to vector<8x8xbf16>
    %c0_27 = arith.constant 0 : index
    %c1_28 = arith.constant 1 : index
    %29 = vector.load %arg3[%c0_27, %c1_28] : memref<8x384xbf16, #tpu.memory_space<vmem>>, vector<8x256xbf16>
    %cst_29 = arith.constant dense<0.000000e+00> : vector<8x256xf32>
    %30 = tpu.matmul %28, %29, %cst_29 {dimension_numbers = #tpu.dot_dimension_numbers<[1], [0], [0], [1], [0, 0, 1, 1], [], []>} : vector<8x8xbf16>, vector<8x256xbf16>, vector<8x256xf32> -> vector<8x256xf32>
    %31 = arith.addf %26, %30 : vector<8x256xf32>
    %c6 = arith.constant 6 : index
    %c0_30 = arith.constant 0 : index
    %c0_31 = arith.constant 0 : index
    %32 = vector.load %arg7[%c6, %c0_30, %c0_31] : memref<9x8x8xbf16, #tpu.memory_space<vmem>>, vector<1x8x8xbf16>
    %33 = vector.shape_cast %32 : vector<1x8x8xbf16> to vector<8x8xbf16>
    %c0_32 = arith.constant 0 : index
    %c9 = arith.constant 9 : index
    %34 = vector.load %arg1[%c0_32, %c9] : memref<8x384xbf16, #tpu.memory_space<vmem>>, vector<8x256xbf16>
    %cst_33 = arith.constant dense<0.000000e+00> : vector<8x256xf32>
    %35 = tpu.matmul %33, %34, %cst_33 {dimension_numbers = #tpu.dot_dimension_numbers<[1], [0], [0], [1], [0, 0, 1, 1], [], []>} : vector<8x8xbf16>, vector<8x256xbf16>, vector<8x256xf32> -> vector<8x256xf32>
    %36 = arith.addf %31, %35 : vector<8x256xf32>
    %c7 = arith.constant 7 : index
    %c0_34 = arith.constant 0 : index
    %c0_35 = arith.constant 0 : index
    %37 = vector.load %arg7[%c7, %c0_34, %c0_35] : memref<9x8x8xbf16, #tpu.memory_space<vmem>>, vector<1x8x8xbf16>
    %38 = vector.shape_cast %37 : vector<1x8x8xbf16> to vector<8x8xbf16>
    %c0_36 = arith.constant 0 : index
    %c9_37 = arith.constant 9 : index
    %39 = vector.load %arg2[%c0_36, %c9_37] : memref<8x384xbf16, #tpu.memory_space<vmem>>, vector<8x256xbf16>
    %cst_38 = arith.constant dense<0.000000e+00> : vector<8x256xf32>
    %40 = tpu.matmul %38, %39, %cst_38 {dimension_numbers = #tpu.dot_dimension_numbers<[1], [0], [0], [1], [0, 0, 1, 1], [], []>} : vector<8x8xbf16>, vector<8x256xbf16>, vector<8x256xf32> -> vector<8x256xf32>
    %41 = arith.addf %36, %40 : vector<8x256xf32>
    %c8 = arith.constant 8 : index
    %c0_39 = arith.constant 0 : index
    %c0_40 = arith.constant 0 : index
    %42 = vector.load %arg7[%c8, %c0_39, %c0_40] : memref<9x8x8xbf16, #tpu.memory_space<vmem>>, vector<1x8x8xbf16>
    %43 = vector.shape_cast %42 : vector<1x8x8xbf16> to vector<8x8xbf16>
    %c0_41 = arith.constant 0 : index
    %c10 = arith.constant 10 : index
    %44 = vector.load %arg1[%c0_41, %c10] : memref<8x384xbf16, #tpu.memory_space<vmem>>, vector<8x256xbf16>
    %cst_42 = arith.constant dense<0.000000e+00> : vector<8x256xf32>
    %45 = tpu.matmul %43, %44, %cst_42 {dimension_numbers = #tpu.dot_dimension_numbers<[1], [0], [0], [1], [0, 0, 1, 1], [], []>} : vector<8x8xbf16>, vector<8x256xbf16>, vector<8x256xf32> -> vector<8x256xf32>
    %46 = arith.addf %41, %45 : vector<8x256xf32>
    %c256_i32 = arith.constant 256 : i32
    %47 = arith.muli %arg0, %c256_i32 : i32
    %48 = tpu.assume_multiple %47, 128 : i32
    %49 = arith.truncf %46 : vector<8x256xf32> to vector<8x256xbf16>
    %c0_43 = arith.constant 0 : index
    %50 = arith.index_cast %48 : i32 to index
    %51 = vector.load %arg15[%c0_43, %50] : memref<8x256xbf16, #tpu.memory_space<vmem>>, vector<8x256xbf16>
    tpu.vector_store %arg15[%c0_43, %50], %49 {strides = array<i32>} : memref<8x256xbf16, #tpu.memory_space<vmem>>, vector<8x256xbf16>,
    %c0_44 = arith.constant 0 : index
    %c0_45 = arith.constant 0 : index
    %52 = vector.load %arg5[%c0_44, %c0_45] : memref<1x256xf32, #tpu.memory_space<vmem>>, vector<1x256xf32>
    %53 = vector.broadcast %52 : vector<1x256xf32> to vector<8x256xf32>
    %54 = arith.mulf %46, %53 : vector<8x256xf32>
    %c0_46 = arith.constant 0 : index
    %c0_47 = arith.constant 0 : index
    %55 = vector.load %arg16[%c0_46, %c0_47] : memref<8x1xf32, #tpu.memory_space<vmem>>, vector<8x1xf32>
    %cst_48 = arith.constant dense<0.000000e+00> : vector<8xf32>
    %56 = vector.multi_reduction <add>, %54, %cst_48 [1] : vector<8x256xf32> to vector<8xf32>
    %57 = vector.shape_cast %56 : vector<8xf32> to vector<8x1xf32>
    %58 = arith.addf %55, %57 : vector<8x1xf32>
    %c0_49 = arith.constant 0 : index
    %c0_50 = arith.constant 0 : index
    %59 = vector.load %arg16[%c0_49, %c0_50] : memref<8x1xf32, #tpu.memory_space<vmem>>, vector<8x1xf32>
    tpu.vector_store %arg16[%c0_49, %c0_50], %58 {strides = array<i32>} : memref<8x1xf32, #tpu.memory_space<vmem>>, vector<8x1xf32>,
    %c0_51 = arith.constant 0 : index
    %c0_52 = arith.constant 0 : index
    %60 = vector.load %arg17[%c0_51, %c0_52] : memref<8x1xf32, #tpu.memory_space<vmem>>, vector<8x1xf32>
    %61 = arith.mulf %54, %46 : vector<8x256xf32>
    %cst_53 = arith.constant dense<0.000000e+00> : vector<8xf32>
    %62 = vector.multi_reduction <add>, %61, %cst_53 [1] : vector<8x256xf32> to vector<8xf32>
    %63 = vector.shape_cast %62 : vector<8xf32> to vector<8x1xf32>
    %64 = arith.addf %60, %63 : vector<8x1xf32>
    %c0_54 = arith.constant 0 : index
    %c0_55 = arith.constant 0 : index
    %65 = vector.load %arg17[%c0_54, %c0_55] : memref<8x1xf32, #tpu.memory_space<vmem>>, vector<8x1xf32>
    tpu.vector_store %arg17[%c0_54, %c0_55], %64 {strides = array<i32>} : memref<8x1xf32, #tpu.memory_space<vmem>>, vector<8x1xf32>,
    %c0_i32_56 = arith.constant 0 : i32
    %66 = arith.cmpi eq, %arg0, %c0_i32_56 : i32
    %67 = arith.extui %66 : i1 to i32
    %c0_i32_57 = arith.constant 0 : i32
    %68 = arith.cmpi ne, %67, %c0_i32_57 : i32
    scf.if %68 {
      %c0_58 = arith.constant 0 : index
      %c0_59 = arith.constant 0 : index
      %69 = vector.load %arg16[%c0_58, %c0_59] : memref<8x1xf32, #tpu.memory_space<vmem>>, vector<8x1xf32>
      %cst_60 = arith.constant 1.280000e+02 : f32
      %70 = vector.broadcast %cst_60 : f32 to vector<8x1xf32>
      %71 = arith.divf %69, %70 : vector<8x1xf32>
      %c0_61 = arith.constant 0 : index
      %c0_62 = arith.constant 0 : index
      %72 = vector.load %arg17[%c0_61, %c0_62] : memref<8x1xf32, #tpu.memory_space<vmem>>, vector<8x1xf32>
      %cst_63 = arith.constant 1.280000e+02 : f32
      %73 = vector.broadcast %cst_63 : f32 to vector<8x1xf32>
      %74 = arith.divf %72, %73 : vector<8x1xf32>
      %75 = arith.mulf %71, %71 : vector<8x1xf32>
      %76 = arith.subf %74, %75 : vector<8x1xf32>
      %cst_64 = arith.constant 0.000000e+00 : f32
      %77 = vector.broadcast %cst_64 : f32 to vector<8x1xf32>
      %78 = arith.maximumf %76, %77 : vector<8x1xf32>
      %c0_65 = arith.constant 0 : index
      %c0_66 = arith.constant 0 : index
      %79 = vector.load %arg8[%c0_65, %c0_66] : memref<8x1xf32, #tpu.memory_space<vmem>>, vector<8x1xf32>
      %cst_67 = arith.constant 9.99999974E-6 : f32
      %80 = vector.broadcast %cst_67 : f32 to vector<8x1xf32>
      %81 = arith.addf %78, %80 : vector<8x1xf32>
      %82 = math.rsqrt %81 : vector<8x1xf32>
      %83 = arith.mulf %79, %82 : vector<8x1xf32>
      %c0_68 = arith.constant 0 : index
      %c0_69 = arith.constant 0 : index
      %84 = vector.load %arg9[%c0_68, %c0_69] : memref<8x1xf32, #tpu.memory_space<vmem>>, vector<8x1xf32>
      %85 = arith.mulf %71, %83 : vector<8x1xf32>
      %86 = arith.subf %84, %85 : vector<8x1xf32>
      %c0_70 = arith.constant 0 : index
      %c0_71 = arith.constant 0 : index
      %87 = vector.load %arg15[%c0_70, %c0_71] : memref<8x256xbf16, #tpu.memory_space<vmem>>, vector<8x256xbf16>
      %88 = arith.extf %87 : vector<8x256xbf16> to vector<8x256xf32>
      %89 = vector.broadcast %83 : vector<8x1xf32> to vector<8x256xf32>
      %90 = arith.mulf %88, %89 : vector<8x256xf32>
      %91 = vector.broadcast %86 : vector<8x1xf32> to vector<8x256xf32>
      %92 = arith.addf %90, %91 : vector<8x256xf32>
      %cst_72 = arith.constant 0.000000e+00 : f32
      %93 = vector.broadcast %cst_72 : f32 to vector<8x256xf32>
      %94 = arith.maximumf %92, %93 : vector<8x256xf32>
      %95 = arith.truncf %94 : vector<8x256xf32> to vector<8x256xbf16>
      %c0_73 = arith.constant 0 : index
      %c0_74 = arith.constant 0 : index
      %96 = vector.load %arg6[%c0_73, %c0_74] : memref<256x2xbf16, #tpu.memory_space<vmem>>, vector<256x2xbf16>
      %cst_75 = arith.constant dense<0.000000e+00> : vector<8x2xf32>
      %97 = tpu.matmul %95, %96, %cst_75 {dimension_numbers = #tpu.dot_dimension_numbers<[1], [0], [0], [1], [0, 0, 1, 1], [], []>} : vector<8x256xbf16>, vector<256x2xbf16>, vector<8x2xf32> -> vector<8x2xf32>
      %cst_76 = arith.constant 1.562500e-02 : f32
      %98 = vector.broadcast %cst_76 : f32 to vector<8x2xf32>
      %99 = arith.mulf %97, %98 : vector<8x2xf32>
      %c0_77 = arith.constant 0 : index
      %c0_78 = arith.constant 0 : index
      %100 = vector.load %arg10[%c0_77, %c0_78] : memref<8x8xbf16, #tpu.memory_space<vmem>>, vector<8x8xbf16>
      %101 = arith.truncf %99 : vector<8x2xf32> to vector<8x2xbf16>
      %cst_79 = arith.constant dense<0.000000e+00> : vector<8x2xf32>
      %102 = tpu.matmul %100, %101, %cst_79 {dimension_numbers = #tpu.dot_dimension_numbers<[1], [0], [0], [1], [0, 0, 1, 1], [], []>} : vector<8x8xbf16>, vector<8x2xbf16>, vector<8x2xf32> -> vector<8x2xf32>
      %c0_80 = arith.constant 0 : index
      %c0_81 = arith.constant 0 : index
      %103 = vector.load %arg11[%c0_80, %c0_81] : memref<8x1xf32, #tpu.memory_space<vmem>>, vector<8x1xf32>
      %104 = vector.broadcast %103 : vector<8x1xf32> to vector<8x2xf32>
      %105 = arith.addf %102, %104 : vector<8x2xf32>
      %cst_82 = arith.constant 0.000000e+00 : f32
      %106 = vector.broadcast %cst_82 : f32 to vector<8x2xf32>
      %107 = arith.maximumf %105, %106 : vector<8x2xf32>
      %c0_83 = arith.constant 0 : index
      %c0_84 = arith.constant 0 : index
      %108 = vector.load %arg12[%c0_83, %c0_84] : memref<2x8xbf16, #tpu.memory_space<vmem>>, vector<2x8xbf16>
      %109 = arith.truncf %107 : vector<8x2xf32> to vector<8x2xbf16>
      %cst_85 = arith.constant dense<0.000000e+00> : vector<2x2xf32>
      %110 = tpu.matmul %108, %109, %cst_85 {dimension_numbers = #tpu.dot_dimension_numbers<[1], [0], [0], [1], [0, 0, 1, 1], [], []>} : vector<2x8xbf16>, vector<8x2xbf16>, vector<2x2xf32> -> vector<2x2xf32>
      %c0_86 = arith.constant 0 : index
      %c0_87 = arith.constant 0 : index
      %111 = vector.load %arg13[%c0_86, %c0_87] : memref<2x1xf32, #tpu.memory_space<vmem>>, vector<2x1xf32>
      %112 = vector.broadcast %111 : vector<2x1xf32> to vector<2x2xf32>
      %113 = arith.addf %110, %112 : vector<2x2xf32>
      %c0_88 = arith.constant 0 : index
      %c0_89 = arith.constant 0 : index
      %114 = vector.load %arg14[%c0_88, %c0_89] : memref<2x2xf32, #tpu.memory_space<vmem>>, vector<2x2xf32>
      tpu.vector_store %arg14[%c0_88, %c0_89], %113 {strides = array<i32>} : memref<2x2xf32, #tpu.memory_space<vmem>>, vector<2x2xf32>,
    } else {
    }
    return
  }
  func.func @transform_0(%arg0: i32) -> (i32, i32) {
    %c0_i32 = arith.constant 0 : i32
    %c0_i32_0 = arith.constant 0 : i32
    return %c0_i32, %arg0 : i32, i32
  }
  func.func @transform_1(%arg0: i32) -> (i32, i32) {
    %c0_i32 = arith.constant 0 : i32
    %c0_i32_0 = arith.constant 0 : i32
    return %c0_i32, %arg0 : i32, i32
  }
  func.func @transform_2(%arg0: i32) -> (i32, i32) {
    %c0_i32 = arith.constant 0 : i32
    %c0_i32_0 = arith.constant 0 : i32
    return %c0_i32, %arg0 : i32, i32
  }
  func.func @transform_3(%arg0: i32) -> (i32, i32) {
    %c0_i32 = arith.constant 0 : i32
    %c0_i32_0 = arith.constant 0 : i32
    return %c0_i32, %arg0 : i32, i32
  }
  func.func @transform_4(%arg0: i32) -> (i32, i32) {
    %c0_i32 = arith.constant 0 : i32
    %c0_i32_0 = arith.constant 0 : i32
    %c0_i32_1 = arith.constant 0 : i32
    return %c0_i32, %c0_i32_0 : i32, i32
  }
  func.func @transform_5(%arg0: i32) -> (i32, i32) {
    %c0_i32 = arith.constant 0 : i32
    %c0_i32_0 = arith.constant 0 : i32
    %c0_i32_1 = arith.constant 0 : i32
    return %c0_i32, %c0_i32_0 : i32, i32
  }
  func.func @transform_6(%arg0: i32) -> (i32, i32, i32) {
    %c0_i32 = arith.constant 0 : i32
    %c0_i32_0 = arith.constant 0 : i32
    %c0_i32_1 = arith.constant 0 : i32
    %c0_i32_2 = arith.constant 0 : i32
    return %c0_i32, %c0_i32_0, %c0_i32_1 : i32, i32, i32
  }
  func.func @transform_7(%arg0: i32) -> (i32, i32) {
    %c0_i32 = arith.constant 0 : i32
    %c0_i32_0 = arith.constant 0 : i32
    %c0_i32_1 = arith.constant 0 : i32
    return %c0_i32, %c0_i32_0 : i32, i32
  }
  func.func @transform_8(%arg0: i32) -> (i32, i32) {
    %c0_i32 = arith.constant 0 : i32
    %c0_i32_0 = arith.constant 0 : i32
    %c0_i32_1 = arith.constant 0 : i32
    return %c0_i32, %c0_i32_0 : i32, i32
  }
  func.func @transform_9(%arg0: i32) -> (i32, i32) {
    %c0_i32 = arith.constant 0 : i32
    %c0_i32_0 = arith.constant 0 : i32
    %c0_i32_1 = arith.constant 0 : i32
    return %c0_i32, %c0_i32_0 : i32, i32
  }
  func.func @transform_10(%arg0: i32) -> (i32, i32) {
    %c0_i32 = arith.constant 0 : i32
    %c0_i32_0 = arith.constant 0 : i32
    %c0_i32_1 = arith.constant 0 : i32
    return %c0_i32, %c0_i32_0 : i32, i32
  }
  func.func @transform_11(%arg0: i32) -> (i32, i32) {
    %c0_i32 = arith.constant 0 : i32
    %c0_i32_0 = arith.constant 0 : i32
    %c0_i32_1 = arith.constant 0 : i32
    return %c0_i32, %c0_i32_0 : i32, i32
  }
  func.func @transform_12(%arg0: i32) -> (i32, i32) {
    %c0_i32 = arith.constant 0 : i32
    %c0_i32_0 = arith.constant 0 : i32
    %c0_i32_1 = arith.constant 0 : i32
    return %c0_i32, %c0_i32_0 : i32, i32
  }
  func.func @transform_13(%arg0: i32) -> (i32, i32) {
    %c0_i32 = arith.constant 0 : i32
    %c0_i32_0 = arith.constant 0 : i32
    %c0_i32_1 = arith.constant 0 : i32
    return %c0_i32, %c0_i32_0 : i32, i32
  }
}

</mosaic_0001>

<llo_original>
// kernel: tpu_custom_call.1
$region0: #{tpu_custom_call.1}
  #allocation0 [shape = 'u32[]', space=smem, size = 0x4, offset = 0x4, fixed_abs, tag = 'smem constant byte address 0x4 - core index']
  #allocation1 [shape = 'u32[72,128]{1,0:T(1,128)}', space=vmem, size = 0x9000, scoped, tag = 'internal scratch']
  #allocation2 [shape = 'bf16[8,256]{1,0:T(8,128)(2,1)}', space=vmem, size = 0x1000, scoped, tag = 'scratch operand']
  #allocation3 [shape = 'f32[8,1]{1,0:T(8,128)}', space=vmem, size = 0x1000, scoped, tag = 'scratch operand']
  #allocation4 [shape = 'f32[8,1]{1,0:T(8,128)}', space=vmem, size = 0x1000, scoped, tag = 'scratch operand']
  %s0 = inlined_call_operand.vmem [shape: bf16[8,384], index: 0, kind: input, shape index: {}]
  %s1 = inlined_call_operand.vmem [shape: bf16[8,384], index: 1, kind: input, shape index: {}]
  %s2 = inlined_call_operand.vmem [shape: bf16[8,384], index: 2, kind: input, shape index: {}]
  %s3 = inlined_call_operand.vmem [shape: bf16[8,384], index: 3, kind: input, shape index: {}]
  %s4 = inlined_call_operand.vmem [shape: f32[1,256], index: 4, kind: input, shape index: {}]
  %s5 = inlined_call_operand.vmem [shape: bf16[256,2], index: 5, kind: input, shape index: {}]
  %s6 = inlined_call_operand.vmem [shape: bf16[9,8,8], index: 6, kind: input, shape index: {}]
  %s7 = inlined_call_operand.vmem [shape: f32[8,1], index: 7, kind: input, shape index: {}]
  %s8 = inlined_call_operand.vmem [shape: f32[8,1], index: 8, kind: input, shape index: {}]
  %s9 = inlined_call_operand.vmem [shape: bf16[8,8], index: 9, kind: input, shape index: {}]
  %s10 = inlined_call_operand.vmem [shape: f32[8,1], index: 10, kind: input, shape index: {}]
  %s11 = inlined_call_operand.vmem [shape: bf16[2,8], index: 11, kind: input, shape index: {}]
  %s12 = inlined_call_operand.vmem [shape: f32[2,1], index: 12, kind: input, shape index: {}]
  %s13 = inlined_call_operand.hbm [shape: f32[2,2], index: 13, kind: output, shape index: {}]
  %s14 = sld [smem:[#allocation0]]
  $region70: #{tpu_custom_call.1} parent=0
    _
  %s16 = ssub.s32 1, %s14
  %s17 = scalar_select 0, %s16, %s14
  $region1: #{tpu_custom_call.1} parent=0
    #allocation5 [shape = 'u8[1024]{0}', space=vmem, size = 0x400, scoped, tag = 'output window, operand 0, single buffered']
    #allocation6 [shape = 's32[1]{0}', space=sflag, size = 0x4, scoped, tag = 'scoped memory for tpu_custom_call.1']
    %18 = vsyncpa [#allocation6], 0
    // Predicated region
    $region2: #{tpu_custom_call.1} parent=1 // pred_check
      _
    $region3: #{tpu_custom_call.1} parent=1 // pred_check_branch
      %20 = sbr.rel (0) target = $region5
    $region4: #{tpu_custom_call.1} parent=1 // pred_region
      _
    $region5: #{tpu_custom_call.1} parent=1 // pred_fallthru
      _
    // Predicated region
    $region6: #{tpu_custom_call.1} parent=1 // pred_check
      _
    $region7: #{tpu_custom_call.1} parent=1 // pred_check_branch
      %22 = sbr.rel (0) target = $region9
    $region8: #{tpu_custom_call.1} parent=1 // pred_region
      _
    $region9: #{tpu_custom_call.1} parent=1 // pred_fallthru
      _
    // Predicated region
    $region10: #{tpu_custom_call.1} parent=1 // pred_check
      _
    $region11: #{tpu_custom_call.1} parent=1 // pred_check_branch
      %24 = sbr.rel (0) target = $region13
    $region12: #{tpu_custom_call.1} parent=1 // pred_region
      _
    $region13: #{tpu_custom_call.1} parent=1 // pred_fallthru
      _
    // Predicated region
    $region14: #{tpu_custom_call.1} parent=1 // pred_check
      _
    $region15: #{tpu_custom_call.1} parent=1 // pred_check_branch
      %26 = sbr.rel (0) target = $region17
    $region16: #{tpu_custom_call.1} parent=1 // pred_region
      _
    $region17: #{tpu_custom_call.1} parent=1 // pred_fallthru
      _
    // Predicated region
    $region18: #{tpu_custom_call.1} parent=1 // pred_check
      _
    $region19: #{tpu_custom_call.1} parent=1 // pred_check_branch
      %28 = sbr.rel (0) target = $region21
    $region20: #{tpu_custom_call.1} parent=1 // pred_region
      _
    $region21: #{tpu_custom_call.1} parent=1 // pred_fallthru
      _
    // Predicated region
    $region22: #{tpu_custom_call.1} parent=1 // pred_check
      _
    $region23: #{tpu_custom_call.1} parent=1 // pred_check_branch
      %30 = sbr.rel (0) target = $region25
    $region24: #{tpu_custom_call.1} parent=1 // pred_region
      _
    $region25: #{tpu_custom_call.1} parent=1 // pred_fallthru
      _
    // Predicated region
    $region26: #{tpu_custom_call.1} parent=1 // pred_check
      _
    $region27: #{tpu_custom_call.1} parent=1 // pred_check_branch
      %32 = sbr.rel (0) target = $region29
    $region28: #{tpu_custom_call.1} parent=1 // pred_region
      _
    $region29: #{tpu_custom_call.1} parent=1 // pred_fallthru
      _
    // Predicated region
    $region30: #{tpu_custom_call.1} parent=1 // pred_check
      _
    $region31: #{tpu_custom_call.1} parent=1 // pred_check_branch
      %34 = sbr.rel (0) target = $region33
    $region32: #{tpu_custom_call.1} parent=1 // pred_region
      _
    $region33: #{tpu_custom_call.1} parent=1 // pred_fallthru
      _
    // Predicated region
    $region34: #{tpu_custom_call.1} parent=1 // pred_check
      _
    $region35: #{tpu_custom_call.1} parent=1 // pred_check_branch
      %36 = sbr.rel (0) target = $region37
    $region36: #{tpu_custom_call.1} parent=1 // pred_region
      _
    $region37: #{tpu_custom_call.1} parent=1 // pred_fallthru
      _
    // Predicated region
    $region38: #{tpu_custom_call.1} parent=1 // pred_check
      _
    $region39: #{tpu_custom_call.1} parent=1 // pred_check_branch
      %38 = sbr.rel (0) target = $region41
    $region40: #{tpu_custom_call.1} parent=1 // pred_region
      _
    $region41: #{tpu_custom_call.1} parent=1 // pred_fallthru
      _
    // Predicated region
    $region42: #{tpu_custom_call.1} parent=1 // pred_check
      _
    $region43: #{tpu_custom_call.1} parent=1 // pred_check_branch
      %40 = sbr.rel (0) target = $region45
    $region44: #{tpu_custom_call.1} parent=1 // pred_region
      _
    $region45: #{tpu_custom_call.1} parent=1 // pred_fallthru
      _
    // Predicated region
    $region46: #{tpu_custom_call.1} parent=1 // pred_check
      _
    $region47: #{tpu_custom_call.1} parent=1 // pred_check_branch
      %42 = sbr.rel (0) target = $region49
    $region48: #{tpu_custom_call.1} parent=1 // pred_region
      _
    $region49: #{tpu_custom_call.1} parent=1 // pred_fallthru
      _
    // Predicated region
    $region50: #{tpu_custom_call.1} parent=1 // pred_check
      _
    $region51: #{tpu_custom_call.1} parent=1 // pred_check_branch
      %44 = sbr.rel (0) target = $region53
    $region52: #{tpu_custom_call.1} parent=1 // pred_region
      _
    $region53: #{tpu_custom_call.1} parent=1 // pred_fallthru
      _
    %p46 = scmp.eq.s32.totalorder 0, 0
    // Predicated region
    $region54: #{tpu_custom_call.1} parent=1 // pred_check
      %p47 = pneg %p46
    $region55: #{tpu_custom_call.1} parent=1 // pred_check_branch
      %49 = sbr.rel (%p47) target = $region57
    $region56: #{tpu_custom_call.1} parent=1 // pred_region
      %vm50 = vcmask 7168
      %51 = vst.msk [vmem:[#allocation3] sm:$0xff] %vm50, 0.0
      %52 = vst.msk [vmem:[#allocation4] sm:$0xff] %vm50, 0.0
    $region57: #{tpu_custom_call.1} parent=1 // pred_fallthru
      _
    %v53 = vld [vmem:[%s6] sm:$0xf]
    %v54 = vld [vmem:[%s0] sm:$0xff]
    %s55 = scalar_lea.vmem %s6, 4
    %v56 = vld [vmem:[%s55] sm:$0xf]
    %v57 = vld [vmem:[%s1] sm:$0xff]
    %v59 = vunpack.c.l.b16 %v57
    %v60 = vunpack.c.h.b16 %v57
    %v61 = vpack.c.b16 %v59, %v59
    %v62 = vpack.c.b16 %v60, %v60
    %vm63 = vcmask 64512
    %v65 = vsel %vm63, %v56, 0
    %vm67 = vcmask 1043456
    %v69 = vsel %vm67, %v61, 0
    %v72 = vsel %vm67, %v62, 0
    %74 = vmatpush.bf16.msra.mxu0 0
    %75 = vmatpush.bf16.msra.mxu0 0
    %76 = vmatpush.bf16.msra.mxu0 0
    %77 = vmatpush.bf16.msra.mxu0 0
    %78 = vmatpush.bf16.msra.mxu0 0
    %79 = vmatpush.bf16.msra.mxu0 0
    %80 = vmatpush.bf16.msra.mxu0 0
    %81 = vmatpush.bf16.msra.mxu0 %v69
    %82 = vmatmul.bf16.gmra.mxu0 %v65
    %v83 = vpop.f32.mrf.mxu0
    %v84 = vadd.f32 0.0, %v83
    %v85 = vpop.f32.mrf.mxu0
    %86 = vdwg.mxu0
    %87 = vmatpush.bf16.msra.mxu0 0
    %88 = vmatpush.bf16.msra.mxu0 0
    %89 = vmatpush.bf16.msra.mxu0 0
    %90 = vmatpush.bf16.msra.mxu0 0
    %91 = vmatpush.bf16.msra.mxu0 0
    %92 = vmatpush.bf16.msra.mxu0 0
    %93 = vmatpush.bf16.msra.mxu0 0
    %94 = vmatpush.bf16.msra.mxu0 %v72
    %95 = vmatmul.bf16.gmra.mxu0 %v65
    %v96 = vpop.f32.mrf.mxu0
    %v97 = vadd.f32 0.0, %v96
    %v98 = vpop.f32.mrf.mxu0
    %99 = vdwg.mxu0
    %v101 = vunpack.c.l.b16 %v54
    %v102 = vunpack.c.h.b16 %v54
    %v103 = vpack.c.b16 %v101, %v101
    %v104 = vpack.c.b16 %v102, %v102
    %v106 = vsel %vm63, %v53, 0
    %v109 = vsel %vm67, %v103, 0
    %v112 = vsel %vm67, %v104, 0
    %114 = vmatpush.bf16.msra.mxu0 0
    %115 = vmatpush.bf16.msra.mxu0 0
    %116 = vmatpush.bf16.msra.mxu0 0
    %117 = vmatpush.bf16.msra.mxu0 0
    %118 = vmatpush.bf16.msra.mxu0 0
    %119 = vmatpush.bf16.msra.mxu0 0
    %120 = vmatpush.bf16.msra.mxu0 0
    %121 = vmatpush.bf16.msra.mxu0 %v109
    %122 = vmatmul.bf16.gmra.mxu0 %v106
    %v123 = vpop.f32.mrf.mxu0
    %v124 = vadd.f32 %v84, %v123
    %v125 = vpop.f32.mrf.mxu0
    %126 = vdwg.mxu0
    %127 = vmatpush.bf16.msra.mxu0 0
    %128 = vmatpush.bf16.msra.mxu0 0
    %129 = vmatpush.bf16.msra.mxu0 0
    %130 = vmatpush.bf16.msra.mxu0 0
    %131 = vmatpush.bf16.msra.mxu0 0
    %132 = vmatpush.bf16.msra.mxu0 0
    %133 = vmatpush.bf16.msra.mxu0 0
    %134 = vmatpush.bf16.msra.mxu0 %v112
    %135 = vmatmul.bf16.gmra.mxu0 %v106
    %v136 = vpop.f32.mrf.mxu0
    %v137 = vadd.f32 %v97, %v136
    %v138 = vpop.f32.mrf.mxu0
    %139 = vdwg.mxu0
    %s140 = scalar_lea.vmem %s6, 8
    %v141 = vld [vmem:[%s140] sm:$0xf]
    %v142 = vld [vmem:[%s0] sm:$0xff]
    %v143 = vld [vmem:[%s0 + $0x8] sm:$0xf]
    %v146 = vunpack.c.l.b16 %v142
    %v147 = vunpack.c.h.b16 %v142
    %v148 = vunpack.c.l.b16 %v143
    %v149 = vpack.c.b16 %v146, %v146
    %v150 = vpack.c.b16 %v147, %v147
    %v151 = vpack.c.b16 %v148, %v148
    %152 = vrot.lane.b32.xlu0 %v149, 127
    %v153 = vpop.permute.xlu0 %152
    %154 = vrot.lane.b32.xlu0 %v150, 127
    %v155 = vpop.permute.xlu0 %154
    %156 = vrot.lane.b32.xlu0 %v151, 127
    %v157 = vpop.permute.xlu0 %156
    %vm158 = vcmask 1039360
    %v159 = vsel %vm158, %v153, %v155
    %v160 = vsel %vm158, %v155, %v157
    %v162 = vsel %vm63, %v141, 0
    %v165 = vsel %vm67, %v159, 0
    %v168 = vsel %vm67, %v160, 0
    %170 = vmatpush.bf16.msra.mxu0 0
    %171 = vmatpush.bf16.msra.mxu0 0
    %172 = vmatpush.bf16.msra.mxu0 0
    %173 = vmatpush.bf16.msra.mxu0 0
    %174 = vmatpush.bf16.msra.mxu0 0
    %175 = vmatpush.bf16.msra.mxu0 0
    %176 = vmatpush.bf16.msra.mxu0 0
    %177 = vmatpush.bf16.msra.mxu0 %v165
    %178 = vmatmul.bf16.gmra.mxu0 %v162
    %v179 = vpop.f32.mrf.mxu0
    %v180 = vadd.f32 0.0, %v179
    %v181 = vpop.f32.mrf.mxu0
    %182 = vdwg.mxu0
    %183 = vmatpush.bf16.msra.mxu0 0
    %184 = vmatpush.bf16.msra.mxu0 0
    %185 = vmatpush.bf16.msra.mxu0 0
    %186 = vmatpush.bf16.msra.mxu0 0
    %187 = vmatpush.bf16.msra.mxu0 0
    %188 = vmatpush.bf16.msra.mxu0 0
    %189 = vmatpush.bf16.msra.mxu0 0
    %190 = vmatpush.bf16.msra.mxu0 %v168
    %191 = vmatmul.bf16.gmra.mxu0 %v162
    %v192 = vpop.f32.mrf.mxu0
    %v193 = vadd.f32 0.0, %v192
    %v194 = vpop.f32.mrf.mxu0
    %195 = vdwg.mxu0
    %v196 = vadd.f32 %v124, %v180
    %v197 = vadd.f32 %v137, %v193
    %s198 = scalar_lea.vmem %s6, 12
    %v199 = vld [vmem:[%s198] sm:$0xf]
    %v200 = vld [vmem:[%s2] sm:$0xff]
    %v202 = vunpack.c.l.b16 %v200
    %v203 = vunpack.c.h.b16 %v200
    %v204 = vpack.c.b16 %v202, %v202
    %v205 = vpack.c.b16 %v203, %v203
    %v207 = vsel %vm63, %v199, 0
    %v210 = vsel %vm67, %v204, 0
    %v213 = vsel %vm67, %v205, 0
    %215 = vmatpush.bf16.msra.mxu0 0
    %216 = vmatpush.bf16.msra.mxu0 0
    %217 = vmatpush.bf16.msra.mxu0 0
    %218 = vmatpush.bf16.msra.mxu0 0
    %219 = vmatpush.bf16.msra.mxu0 0
    %220 = vmatpush.bf16.msra.mxu0 0
    %221 = vmatpush.bf16.msra.mxu0 0
    %222 = vmatpush.bf16.msra.mxu0 %v210
    %223 = vmatmul.bf16.gmra.mxu0 %v207
    %v224 = vpop.f32.mrf.mxu0
    %v225 = vadd.f32 0.0, %v224
    %v226 = vpop.f32.mrf.mxu0
    %227 = vdwg.mxu0
    %228 = vmatpush.bf16.msra.mxu0 0
    %229 = vmatpush.bf16.msra.mxu0 0
    %230 = vmatpush.bf16.msra.mxu0 0
    %231 = vmatpush.bf16.msra.mxu0 0
    %232 = vmatpush.bf16.msra.mxu0 0
    %233 = vmatpush.bf16.msra.mxu0 0
    %234 = vmatpush.bf16.msra.mxu0 0
    %235 = vmatpush.bf16.msra.mxu0 %v213
    %236 = vmatmul.bf16.gmra.mxu0 %v207
    %v237 = vpop.f32.mrf.mxu0
    %v238 = vadd.f32 0.0, %v237
    %v239 = vpop.f32.mrf.mxu0
    %240 = vdwg.mxu0
    %v241 = vadd.f32 %v196, %v225
    %v242 = vadd.f32 %v197, %v238
    %s243 = scalar_lea.vmem %s6, 16
    %v244 = vld [vmem:[%s243] sm:$0xf]
    %v245 = vld [vmem:[%s3] sm:$0xff]
    %v247 = vunpack.c.l.b16 %v245
    %v248 = vunpack.c.h.b16 %v245
    %v249 = vpack.c.b16 %v247, %v247
    %v250 = vpack.c.b16 %v248, %v248
    %v252 = vsel %vm63, %v244, 0
    %v255 = vsel %vm67, %v249, 0
    %v258 = vsel %vm67, %v250, 0
    %260 = vmatpush.bf16.msra.mxu0 0
    %261 = vmatpush.bf16.msra.mxu0 0
    %262 = vmatpush.bf16.msra.mxu0 0
    %263 = vmatpush.bf16.msra.mxu0 0
    %264 = vmatpush.bf16.msra.mxu0 0
    %265 = vmatpush.bf16.msra.mxu0 0
    %266 = vmatpush.bf16.msra.mxu0 0
    %267 = vmatpush.bf16.msra.mxu0 %v255
    %268 = vmatmul.bf16.gmra.mxu0 %v252
    %v269 = vpop.f32.mrf.mxu0
    %v270 = vadd.f32 0.0, %v269
    %v271 = vpop.f32.mrf.mxu0
    %272 = vdwg.mxu0
    %273 = vmatpush.bf16.msra.mxu0 0
    %274 = vmatpush.bf16.msra.mxu0 0
    %275 = vmatpush.bf16.msra.mxu0 0
    %276 = vmatpush.bf16.msra.mxu0 0
    %277 = vmatpush.bf16.msra.mxu0 0
    %278 = vmatpush.bf16.msra.mxu0 0
    %279 = vmatpush.bf16.msra.mxu0 0
    %280 = vmatpush.bf16.msra.mxu0 %v258
    %281 = vmatmul.bf16.gmra.mxu0 %v252
    %v282 = vpop.f32.mrf.mxu0
    %v283 = vadd.f32 0.0, %v282
    %v284 = vpop.f32.mrf.mxu0
    %285 = vdwg.mxu0
    %v286 = vadd.f32 %v241, %v270
    %v287 = vadd.f32 %v242, %v283
    %s288 = scalar_lea.vmem %s6, 20
    %v289 = vld [vmem:[%s288] sm:$0xf]
    %v290 = vld [vmem:[%s2] sm:$0xff]
    %v291 = vld [vmem:[%s2 + $0x8] sm:$0xf]
    %v294 = vunpack.c.l.b16 %v290
    %v295 = vunpack.c.h.b16 %v290
    %v296 = vunpack.c.l.b16 %v291
    %v297 = vpack.c.b16 %v294, %v294
    %v298 = vpack.c.b16 %v295, %v295
    %v299 = vpack.c.b16 %v296, %v296
    %300 = vrot.lane.b32.xlu0 %v297, 127
    %v301 = vpop.permute.xlu0 %300
    %302 = vrot.lane.b32.xlu0 %v298, 127
    %v303 = vpop.permute.xlu0 %302
    %304 = vrot.lane.b32.xlu0 %v299, 127
    %v305 = vpop.permute.xlu0 %304
    %v306 = vsel %vm158, %v301, %v303
    %v307 = vsel %vm158, %v303, %v305
    %v309 = vsel %vm63, %v289, 0
    %v312 = vsel %vm67, %v306, 0
    %v315 = vsel %vm67, %v307, 0
    %317 = vmatpush.bf16.msra.mxu0 0
    %318 = vmatpush.bf16.msra.mxu0 0
    %319 = vmatpush.bf16.msra.mxu0 0
    %320 = vmatpush.bf16.msra.mxu0 0
    %321 = vmatpush.bf16.msra.mxu0 0
    %322 = vmatpush.bf16.msra.mxu0 0
    %323 = vmatpush.bf16.msra.mxu0 0
    %324 = vmatpush.bf16.msra.mxu0 %v312
    %325 = vmatmul.bf16.gmra.mxu0 %v309
    %v326 = vpop.f32.mrf.mxu0
    %v327 = vadd.f32 0.0, %v326
    %v328 = vpop.f32.mrf.mxu0
    %329 = vdwg.mxu0
    %330 = vmatpush.bf16.msra.mxu0 0
    %331 = vmatpush.bf16.msra.mxu0 0
    %332 = vmatpush.bf16.msra.mxu0 0
    %333 = vmatpush.bf16.msra.mxu0 0
    %334 = vmatpush.bf16.msra.mxu0 0
    %335 = vmatpush.bf16.msra.mxu0 0
    %336 = vmatpush.bf16.msra.mxu0 0
    %337 = vmatpush.bf16.msra.mxu0 %v315
    %338 = vmatmul.bf16.gmra.mxu0 %v309
    %v339 = vpop.f32.mrf.mxu0
    %v340 = vadd.f32 0.0, %v339
    %v341 = vpop.f32.mrf.mxu0
    %342 = vdwg.mxu0
    %v343 = vadd.f32 %v286, %v327
    %v344 = vadd.f32 %v287, %v340
    %s345 = scalar_lea.vmem %s6, 24
    %v346 = vld [vmem:[%s345] sm:$0xf]
    %347 = vrot.lane.b32.xlu0 %v149, 119
    %v348 = vpop.permute.xlu0 %347
    %349 = vrot.lane.b32.xlu0 %v150, 119
    %v350 = vpop.permute.xlu0 %349
    %351 = vrot.lane.b32.xlu0 %v151, 119
    %v352 = vpop.permute.xlu0 %351
    %vm353 = vcmask 973824
    %v354 = vsel %vm353, %v348, %v350
    %v355 = vsel %vm353, %v350, %v352
    %v357 = vsel %vm63, %v346, 0
    %v360 = vsel %vm67, %v354, 0
    %v363 = vsel %vm67, %v355, 0
    %365 = vmatpush.bf16.msra.mxu0 0
    %366 = vmatpush.bf16.msra.mxu0 0
    %367 = vmatpush.bf16.msra.mxu0 0
    %368 = vmatpush.bf16.msra.mxu0 0
    %369 = vmatpush.bf16.msra.mxu0 0
    %370 = vmatpush.bf16.msra.mxu0 0
    %371 = vmatpush.bf16.msra.mxu0 0
    %372 = vmatpush.bf16.msra.mxu0 %v360
    %373 = vmatmul.bf16.gmra.mxu0 %v357
    %v374 = vpop.f32.mrf.mxu0
    %v375 = vadd.f32 0.0, %v374
    %v376 = vpop.f32.mrf.mxu0
    %377 = vdwg.mxu0
    %378 = vmatpush.bf16.msra.mxu0 0
    %379 = vmatpush.bf16.msra.mxu0 0
    %380 = vmatpush.bf16.msra.mxu0 0
    %381 = vmatpush.bf16.msra.mxu0 0
    %382 = vmatpush.bf16.msra.mxu0 0
    %383 = vmatpush.bf16.msra.mxu0 0
    %384 = vmatpush.bf16.msra.mxu0 0
    %385 = vmatpush.bf16.msra.mxu0 %v363
    %386 = vmatmul.bf16.gmra.mxu0 %v357
    %v387 = vpop.f32.mrf.mxu0
    %v388 = vadd.f32 0.0, %v387
    %v389 = vpop.f32.mrf.mxu0
    %390 = vdwg.mxu0
    %v391 = vadd.f32 %v343, %v375
    %v392 = vadd.f32 %v344, %v388
    %s393 = scalar_lea.vmem %s6, 28
    %v394 = vld [vmem:[%s393] sm:$0xf]
    %v395 = vld [vmem:[%s1] sm:$0xff]
    %v396 = vld [vmem:[%s1 + $0x8] sm:$0xf]
    %v399 = vunpack.c.l.b16 %v395
    %v400 = vunpack.c.h.b16 %v395
    %v401 = vunpack.c.l.b16 %v396
    %v402 = vpack.c.b16 %v399, %v399
    %v403 = vpack.c.b16 %v400, %v400
    %v404 = vpack.c.b16 %v401, %v401
    %405 = vrot.lane.b32.xlu0 %v402, 119
    %v406 = vpop.permute.xlu0 %405
    %407 = vrot.lane.b32.xlu0 %v403, 119
    %v408 = vpop.permute.xlu0 %407
    %409 = vrot.lane.b32.xlu0 %v404, 119
    %v410 = vpop.permute.xlu0 %409
    %v411 = vsel %vm353, %v406, %v408
    %v412 = vsel %vm353, %v408, %v410
    %v414 = vsel %vm63, %v394, 0
    %v417 = vsel %vm67, %v411, 0
    %v420 = vsel %vm67, %v412, 0
    %422 = vmatpush.bf16.msra.mxu0 0
    %423 = vmatpush.bf16.msra.mxu0 0
    %424 = vmatpush.bf16.msra.mxu0 0
    %425 = vmatpush.bf16.msra.mxu0 0
    %426 = vmatpush.bf16.msra.mxu0 0
    %427 = vmatpush.bf16.msra.mxu0 0
    %428 = vmatpush.bf16.msra.mxu0 0
    %429 = vmatpush.bf16.msra.mxu0 %v417
    %430 = vmatmul.bf16.gmra.mxu0 %v414
    %v431 = vpop.f32.mrf.mxu0
    %v432 = vadd.f32 0.0, %v431
    %v433 = vpop.f32.mrf.mxu0
    %434 = vdwg.mxu0
    %435 = vmatpush.bf16.msra.mxu0 0
    %436 = vmatpush.bf16.msra.mxu0 0
    %437 = vmatpush.bf16.msra.mxu0 0
    %438 = vmatpush.bf16.msra.mxu0 0
    %439 = vmatpush.bf16.msra.mxu0 0
    %440 = vmatpush.bf16.msra.mxu0 0
    %441 = vmatpush.bf16.msra.mxu0 0
    %442 = vmatpush.bf16.msra.mxu0 %v420
    %443 = vmatmul.bf16.gmra.mxu0 %v414
    %v444 = vpop.f32.mrf.mxu0
    %v445 = vadd.f32 0.0, %v444
    %v446 = vpop.f32.mrf.mxu0
    %447 = vdwg.mxu0
    %v448 = vadd.f32 %v391, %v432
    %v449 = vadd.f32 %v392, %v445
    %s450 = scalar_lea.vmem %s6, 32
    %v451 = vld [vmem:[%s450] sm:$0xf]
    %452 = vrot.lane.b32.xlu0 %v149, 118
    %v453 = vpop.permute.xlu0 %452
    %454 = vrot.lane.b32.xlu0 %v150, 118
    %v455 = vpop.permute.xlu0 %454
    %456 = vrot.lane.b32.xlu0 %v151, 118
    %v457 = vpop.permute.xlu0 %456
    %vm458 = vcmask 965632
    %v459 = vsel %vm458, %v453, %v455
    %v460 = vsel %vm458, %v455, %v457
    %v462 = vsel %vm63, %v451, 0
    %v465 = vsel %vm67, %v459, 0
    %v468 = vsel %vm67, %v460, 0
    %470 = vmatpush.bf16.msra.mxu0 0
    %471 = vmatpush.bf16.msra.mxu0 0
    %472 = vmatpush.bf16.msra.mxu0 0
    %473 = vmatpush.bf16.msra.mxu0 0
    %474 = vmatpush.bf16.msra.mxu0 0
    %475 = vmatpush.bf16.msra.mxu0 0
    %476 = vmatpush.bf16.msra.mxu0 0
    %477 = vmatpush.bf16.msra.mxu0 %v465
    %478 = vmatmul.bf16.gmra.mxu0 %v462
    %v479 = vpop.f32.mrf.mxu0
    %v480 = vadd.f32 0.0, %v479
    %v481 = vpop.f32.mrf.mxu0
    %482 = vdwg.mxu0
    %483 = vmatpush.bf16.msra.mxu0 0
    %484 = vmatpush.bf16.msra.mxu0 0
    %485 = vmatpush.bf16.msra.mxu0 0
    %486 = vmatpush.bf16.msra.mxu0 0
    %487 = vmatpush.bf16.msra.mxu0 0
    %488 = vmatpush.bf16.msra.mxu0 0
    %489 = vmatpush.bf16.msra.mxu0 0
    %490 = vmatpush.bf16.msra.mxu0 %v468
    %491 = vmatmul.bf16.gmra.mxu0 %v462
    %v492 = vpop.f32.mrf.mxu0
    %v493 = vadd.f32 0.0, %v492
    %v494 = vpop.f32.mrf.mxu0
    %495 = vdwg.mxu0
    %v496 = vadd.f32 %v448, %v480
    %v497 = vadd.f32 %v449, %v493
    %s498 = smul.u32 0, 256
    %v499 = vpack.c.bf16 %v497, %v496
    %s500 = sshra.s32 %s498, 7
    %s501 = sand.u32 %s498, 127
    %s502 = smul.addr %s500, 4
    %s503 = scalar_lea.vmem [#allocation2], %s502
    %504 = vst [vmem:[%s503] sm:$0xff] %v499
    %v505 = vld [vmem:[%s4] sm:$0x3]
    %v507 = vperm.slane %v505, 0
    %v508 = vperm.slane %v505, 1
    %v511 = vmul.f32 %v496, %v507
    %v512 = vmul.f32 %v497, %v508
    %v513 = vld [vmem:[#allocation3] sm:$0xff]
    %v514 = vadd.f32 %v511, %v512
    %515 = vadd.xlane.f32.xlu0 %v514
    %v516 = vpop.xlane.xlu0 %515
    %v517 = vadd.f32 %v513, %v516
    %vm518 = vcmask 7168
    %519 = vst.msk [vmem:[#allocation3] sm:$0xff] %vm518, %v517
    %v520 = vld [vmem:[#allocation4] sm:$0xff]
    %v521 = vmul.f32 %v511, %v496
    %v522 = vmul.f32 %v512, %v497
    %v523 = vadd.f32 %v521, %v522
    %524 = vadd.xlane.f32.xlu0 %v523
    %v525 = vpop.xlane.xlu0 %524
    %v526 = vadd.f32 %v520, %v525
    %527 = vst.msk [vmem:[#allocation4] sm:$0xff] %vm518, %v526
    // Predicated region
    $region58: #{tpu_custom_call.1} parent=1 // pred_check
      %p528 = pneg %p46
    $region59: #{tpu_custom_call.1} parent=1 // pred_check_branch
      %530 = sbr.rel (%p528) target = $region61
    $region60: #{tpu_custom_call.1} parent=1 // pred_region
      %v531 = vld [vmem:[#allocation3] sm:$0xff]
      %v532 = vrcp.pop 128.0
      %v533 = vmul.f32 128.0, %v532
      %v534 = vsub.f32 1.0, %v533
      %v535 = vmul.f32 %v532, %v534
      %v536 = vadd.f32 %v532, %v535
      %vm537 = vweird.f32 %v532
      %v538 = vsel %vm537, %v532, %v536
      %v539 = vmul.f32 %v531, %v538
      %v540 = vld [vmem:[#allocation4] sm:$0xff]
      %v541 = vmul.f32 %v540, %v538
      %v542 = vmul.f32 %v539, %v539
      %v543 = vsub.f32 %v541, %v542
      %v544 = vmax.f32 %v543, 0.0
      %v545 = vld [vmem:[%s7] sm:$0xff]
      %v546 = vadd.f32 %v544, 1e-05
      %v547 = vrsqrt.pop %v546
      %v548 = vmul.f32 %v547, %v546
      %v549 = vmul.f32 %v548, %v547
      %v550 = vmul.f32 0.5, %v549
      %v551 = vsub.f32 1.5, %v550
      %v552 = vmul.f32 %v547, %v551
      %vm553 = vweird.f32 %v546
      %vm554 = vweird.f32 %v547
      %vm555 = vmor %vm553, %vm554
      %v556 = vsel %vm555, %v547, %v552
      %v557 = vmul.f32 %v545, %v556
      %v558 = vld [vmem:[%s8] sm:$0xff]
      %v559 = vmul.f32 %v539, %v557
      %v560 = vsub.f32 %v558, %v559
      %v561 = vld [vmem:[#allocation2] sm:$0xff]
      %v562 = vunpack.c.l.bf16 %v561
      %v563 = vunpack.c.h.bf16 %v561
      %565 = vset.pattern.permute.xlu0 0
      %566 = vperm.xlu0 %565, %v557
      %v567 = vpop.permute.xlu0 %566
      %v569 = vmul.f32 %v562, %v567
      %v570 = vmul.f32 %v563, %v567
      %572 = vset.pattern.permute.xlu0 0
      %573 = vperm.xlu0 %572, %v560
      %v574 = vpop.permute.xlu0 %573
      %v576 = vadd.f32 %v569, %v574
      %v577 = vadd.f32 %v570, %v574
      %v578 = vmax.f32 %v576, 0.0
      %v579 = vmax.f32 %v577, 0.0
      %v580 = vpack.c.bf16 %v578, %v578
      %v581 = vpack.c.bf16 %v579, %v579
      %v582 = vld [vmem:[%s5] sm:$0xf]
      %v583 = vld [vmem:[%s5 + $0x4] sm:$0xf]
      %v584 = vld [vmem:[%s5 + $0x8] sm:$0xf]
      %v585 = vld [vmem:[%s5 + $0xc] sm:$0xf]
      %v586 = vld [vmem:[%s5 + $0x10] sm:$0xf]
      %v587 = vld [vmem:[%s5 + $0x14] sm:$0xf]
      %v588 = vld [vmem:[%s5 + $0x18] sm:$0xf]
      %v589 = vld [vmem:[%s5 + $0x1c] sm:$0xf]
      %v590 = vld [vmem:[%s5 + $0x20] sm:$0xf]
      %v591 = vld [vmem:[%s5 + $0x24] sm:$0xf]
      %v592 = vld [vmem:[%s5 + $0x28] sm:$0xf]
      %v593 = vld [vmem:[%s5 + $0x2c] sm:$0xf]
      %v594 = vld [vmem:[%s5 + $0x30] sm:$0xf]
      %v595 = vld [vmem:[%s5 + $0x34] sm:$0xf]
      %v596 = vld [vmem:[%s5 + $0x38] sm:$0xf]
      %v597 = vld [vmem:[%s5 + $0x3c] sm:$0xf]
      %v598 = vld [vmem:[%s5 + $0x40] sm:$0xf]
      %v599 = vld [vmem:[%s5 + $0x44] sm:$0xf]
      %v600 = vld [vmem:[%s5 + $0x48] sm:$0xf]
      %v601 = vld [vmem:[%s5 + $0x4c] sm:$0xf]
      %v602 = vld [vmem:[%s5 + $0x50] sm:$0xf]
      %v603 = vld [vmem:[%s5 + $0x54] sm:$0xf]
      %v604 = vld [vmem:[%s5 + $0x58] sm:$0xf]
      %v605 = vld [vmem:[%s5 + $0x5c] sm:$0xf]
      %v606 = vld [vmem:[%s5 + $0x60] sm:$0xf]
      %v607 = vld [vmem:[%s5 + $0x64] sm:$0xf]
      %v608 = vld [vmem:[%s5 + $0x68] sm:$0xf]
      %v609 = vld [vmem:[%s5 + $0x6c] sm:$0xf]
      %v610 = vld [vmem:[%s5 + $0x70] sm:$0xf]
      %v611 = vld [vmem:[%s5 + $0x74] sm:$0xf]
      %v612 = vld [vmem:[%s5 + $0x78] sm:$0xf]
      %v613 = vld [vmem:[%s5 + $0x7c] sm:$0xf]
      %v646 = vunpack.c.l.b16 %v582
      %v647 = vunpack.c.l.b16 %v583
      %v648 = vunpack.c.l.b16 %v584
      %v649 = vunpack.c.l.b16 %v585
      %v650 = vunpack.c.l.b16 %v586
      %v651 = vunpack.c.l.b16 %v587
      %v652 = vunpack.c.l.b16 %v588
      %v653 = vunpack.c.l.b16 %v589
      %v654 = vunpack.c.l.b16 %v590
      %v655 = vunpack.c.l.b16 %v591
      %v656 = vunpack.c.l.b16 %v592
      %v657 = vunpack.c.l.b16 %v593
      %v658 = vunpack.c.l.b16 %v594
      %v659 = vunpack.c.l.b16 %v595
      %v660 = vunpack.c.l.b16 %v596
      %v661 = vunpack.c.l.b16 %v597
      %v662 = vunpack.c.l.b16 %v598
      %v663 = vunpack.c.l.b16 %v599
      %v664 = vunpack.c.l.b16 %v600
      %v665 = vunpack.c.l.b16 %v601
      %v666 = vunpack.c.l.b16 %v602
      %v667 = vunpack.c.l.b16 %v603
      %v668 = vunpack.c.l.b16 %v604
      %v669 = vunpack.c.l.b16 %v605
      %v670 = vunpack.c.l.b16 %v606
      %v671 = vunpack.c.l.b16 %v607
      %v672 = vunpack.c.l.b16 %v608
      %v673 = vunpack.c.l.b16 %v609
      %v674 = vunpack.c.l.b16 %v610
      %v675 = vunpack.c.l.b16 %v611
      %v676 = vunpack.c.l.b16 %v612
      %v677 = vunpack.c.l.b16 %v613
      %v678 = vpack.c.b16 %v647, %v646
      %v679 = vpack.c.b16 %v649, %v648
      %v680 = vpack.c.b16 %v651, %v650
      %v681 = vpack.c.b16 %v653, %v652
      %v682 = vpack.c.b16 %v655, %v654
      %v683 = vpack.c.b16 %v657, %v656
      %v684 = vpack.c.b16 %v659, %v658
      %v685 = vpack.c.b16 %v661, %v660
      %v686 = vpack.c.b16 %v663, %v662
      %v687 = vpack.c.b16 %v665, %v664
      %v688 = vpack.c.b16 %v667, %v666
      %v689 = vpack.c.b16 %v669, %v668
      %v690 = vpack.c.b16 %v671, %v670
      %v691 = vpack.c.b16 %v673, %v672
      %v692 = vpack.c.b16 %v675, %v674
      %v693 = vpack.c.b16 %v677, %v676
      %710 = vmatpush.bf16.msra.mxu0 %v685
      %711 = vmatpush.bf16.msra.mxu0 %v684
      %712 = vmatpush.bf16.msra.mxu0 %v683
      %713 = vmatpush.bf16.msra.mxu0 %v682
      %714 = vmatpush.bf16.msra.mxu0 %v681
      %715 = vmatpush.bf16.msra.mxu0 %v680
      %716 = vmatpush.bf16.msra.mxu0 %v679
      %717 = vmatpush.bf16.msra.mxu0 %v678
      %718 = vmatmul.bf16.gmra.mxu0 %v580
      %v719 = vpop.f32.mrf.mxu0
      %v720 = vadd.f32 0.0, %v719
      %v721 = vpop.f32.mrf.mxu0
      %722 = vdwg.mxu0
      %723 = vmatpush.bf16.msra.mxu0 %v693
      %724 = vmatpush.bf16.msra.mxu0 %v692
      %725 = vmatpush.bf16.msra.mxu0 %v691
      %726 = vmatpush.bf16.msra.mxu0 %v690
      %727 = vmatpush.bf16.msra.mxu0 %v689
      %728 = vmatpush.bf16.msra.mxu0 %v688
      %729 = vmatpush.bf16.msra.mxu0 %v687
      %730 = vmatpush.bf16.msra.mxu0 %v686
      %731 = vmatmul.bf16.gmra.mxu0 %v581
      %v732 = vpop.f32.mrf.mxu0
      %v733 = vadd.f32 %v720, %v732
      %v734 = vpop.f32.mrf.mxu0
      %735 = vdwg.mxu0
      %v736 = vmul.f32 %v733, 0.015625
      %v737 = vld [vmem:[%s9] sm:$0xf]
      %v738 = vpack.c.bf16 %v736, %v736
      %v739 = vld [vmem:[%s10] sm:$0xff]
      %741 = vset.pattern.permute.xlu0 0
      %742 = vperm.xlu0 %741, %v739
      %v743 = vpop.permute.xlu0 %742
      %v746 = vsel %vm63, %v737, 0
      %v749 = vsel %vm67, %v738, 0
      %751 = vmatpush.bf16.msra.mxu0 0
      %752 = vmatpush.bf16.msra.mxu0 0
      %753 = vmatpush.bf16.msra.mxu0 0
      %754 = vmatpush.bf16.msra.mxu0 0
      %755 = vmatpush.bf16.msra.mxu0 0
      %756 = vmatpush.bf16.msra.mxu0 0
      %757 = vmatpush.bf16.msra.mxu0 0
      %758 = vmatpush.bf16.msra.mxu0 %v749
      %759 = vmatmul.bf16.gmra.mxu0 %v746
      %v760 = vpop.f32.mrf.mxu0
      %v761 = vadd.f32 %v743, %v760
      %v762 = vpop.f32.mrf.mxu0
      %763 = vdwg.mxu0
      %v764 = vmax.f32 %v761, 0.0
      %v765 = vld [vmem:[%s11] sm:$0x1]
      %v766 = vpack.c.bf16 %v764, %v764
      %v767 = vld [vmem:[%s12] sm:$0x3]
      %769 = vset.pattern.permute.xlu0 0
      %770 = vperm.xlu0 %769, %v767
      %v771 = vpop.permute.xlu0 %770
      %v774 = vsel %vm63, %v765, 0
      %v777 = vsel %vm67, %v766, 0
      %779 = vmatpush.bf16.msra.mxu0 0
      %780 = vmatpush.bf16.msra.mxu0 0
      %781 = vmatpush.bf16.msra.mxu0 0
      %782 = vmatpush.bf16.msra.mxu0 0
      %783 = vmatpush.bf16.msra.mxu0 0
      %784 = vmatpush.bf16.msra.mxu0 0
      %785 = vmatpush.bf16.msra.mxu0 0
      %786 = vmatpush.bf16.msra.mxu0 %v777
      %787 = vmatmul.bf16.gmra.mxu0 %v774
      %v788 = vpop.f32.mrf.mxu0
      %v789 = vadd.f32 %v771, %v788
      %v790 = vpop.f32.mrf.mxu0
      %791 = vdwg.mxu0
      %vm792 = vcmask 9216
      %793 = vst.msk [vmem:[#allocation5] sm:$0x3] %vm792, %v789
    $region61: #{tpu_custom_call.1} parent=1 // pred_fallthru
      _
    // Predicated region
    $region62: #{tpu_custom_call.1} parent=1 // pred_check
      _
    $region63: #{tpu_custom_call.1} parent=1 // pred_check_branch
      %795 = sbr.rel (0) target = $region65
    $region64: #{tpu_custom_call.1} parent=1 // pred_region
      %797 = vsyncadd [#allocation6], 0
      %s799 = sshll.u32 [#allocation5], 4
      %s800 = int_to_ptr.vmem [resolvable:$true] %s799
      %s801 = sshll.u32 %s13, 4
      %s802 = int_to_ptr.hbm [resolvable:$true] %s801
      %804 = dma.vmem_to_hbm [thread:$0]  %s800, 32, %s802, [#allocation6]
    $region65: #{tpu_custom_call.1} parent=1 // pred_fallthru
      _
    // Predicated region
    $region66: #{tpu_custom_call.1} parent=1 // pred_check
      _
    $region67: #{tpu_custom_call.1} parent=1 // pred_check_branch
      %806 = sbr.rel (0) target = $region69
    $region68: #{tpu_custom_call.1} parent=1 // pred_region
      %808 = dma.done [#allocation6], 32
    $region69: #{tpu_custom_call.1} parent=1 // pred_fallthru
      _
    %809 = vsyncpa [#allocation6], 1

</llo_original>
